<compile_context>
chip_gen: v7x
topology: tpu7x:2x2x1
jax: 0.10.0
libtpu: 0.0.40
codegen_flags: <defaults>
</compile_context>

<pallas_src>
import jax
import jax.numpy as jnp
from jax.experimental import pallas as pl
from jax.experimental.pallas import tpu as pltpu


def _round_up(x, m):
    return ((x + m - 1) // m) * m


# ----------------------------------------------------------------------------
# Pallas kernel: full MLP forward for one batch tile (batch on the lane axis).
# ----------------------------------------------------------------------------
def mlp_kernel(z_ref, w1_ref, b1_ref, w2_ref, b2_ref, w3_ref, b3_ref, o_ref):
    # In-kernel cast to the MXU input dtype (bf16 on v6e/v7x, f32 on v5e);
    # saves a wrapper-side HBM read+write of z. Bias/ReLU/accum stay f32.
    z = z_ref[...].astype(w1_ref.dtype)                                    # (D, tb)

    # Layer 1 (MXU): (H, D) @ (D, tb) -> (H, tb), f32 accumulation.
    h1 = jnp.dot(w1_ref[...], z, preferred_element_type=jnp.float32)
    h1 = jnp.maximum(h1 + b1_ref[...], 0.0)                                # b1 is (H, 1)

    # Layer 2 (MXU): (H, H) @ (H, tb) -> (H, tb).
    h2 = jnp.dot(w2_ref[...], h1.astype(w2_ref.dtype),
                 preferred_element_type=jnp.float32)
    h2 = jnp.maximum(h2 + b2_ref[...], 0.0)

    # Layer 3 (MXU): (1, H) @ (H, tb) -> (1, tb). Lane-dense output produced
    # directly; K=H sits on sublanes and all tb result lanes are filled.
    out = jnp.dot(w3_ref[...], h2, preferred_element_type=jnp.float32)
    o_ref[...] = (out + b3_ref[0]).astype(o_ref.dtype)


# ----------------------------------------------------------------------------
# Tiling: lane-dense tiles (multiples of 128), large enough to amortize the
# per-grid-step overhead, balanced across `num_cores` TensorCores (v7x).
# ----------------------------------------------------------------------------
def _batch_tiling(B, tb_max, num_cores):
    b128 = _round_up(max(B, 1), 128)
    nt = max(num_cores, pl.cdiv(b128, tb_max))
    nt = _round_up(nt, num_cores)                       # balanced tile count
    tb = min(tb_max, _round_up(pl.cdiv(b128, nt), 128))
    nt = _round_up(pl.cdiv(b128, tb), num_cores)
    return tb, nt


def ddexux_forward(z_batch, params, *, tb_max=1024,
                   compute_dtype=jnp.float32, num_cores=1):
    """DataDistanceEstimatorXux.forward: energy = net(z_batch), shape (B, 1).

    z_batch: (B, dim_in) float32, dim_in = dim_x + dim_u + dim_x.
    compute_dtype: MXU input dtype (use jnp.bfloat16 on v6e/v7x, f32 on v5e).
    num_cores: set 2 on v7x so batch tiles load-balance the megacore.
    """
    w1, b1, w2, b2, w3, b3 = params
    B, dim_in = z_batch.shape
    H = w1.shape[1]
    assert tb_max % 128 == 0, "tb_max must be a multiple of 128"

    tb, num_tiles = _batch_tiling(B, tb_max, num_cores)
    b_pad = tb * num_tiles

    # Batch-on-lanes: feed z transposed, (dim_in, B_pad), still f32 (the cast
    # happens inside the kernel). Pad only when B doesn't fill the tiles.
    z_t = z_batch.astype(jnp.float32).T
    if b_pad != B:
        z_t = jnp.pad(z_t, ((0, 0), (0, b_pad - B)))

    # Weights pre-transposed once (tiny); biases as (H, 1) columns so they
    # broadcast across the lane (batch) axis; b3 is a scalar in SMEM.
    w1_t = w1.T.astype(compute_dtype)                  # (H, dim_in)
    w2_t = w2.T.astype(compute_dtype)                  # (H, H)
    b1_c = b1.reshape(H, 1).astype(jnp.float32)
    b2_c = b2.reshape(H, 1).astype(jnp.float32)
    w3_row = w3.reshape(1, H).astype(jnp.float32)      # (H, 1) -> (1, H) row
    b3_s = b3.reshape(1).astype(jnp.float32)           # scalar, lives in SMEM

    itemsize = jnp.dtype(compute_dtype).itemsize
    cost = pl.CostEstimate(
        flops=2 * b_pad * (dim_in * H + H * H + H),
        transcendentals=0,
        bytes_accessed=(b_pad * dim_in * 4                      # z (f32 in)
                        + b_pad * 4                             # output
                        + (dim_in * H + H * H) * itemsize       # w1, w2
                        + (2 * H + H + 1) * 4),                 # b1, b2, w3, b3
    )

    out = pl.pallas_call(
        mlp_kernel,
        out_shape=jax.ShapeDtypeStruct((1, b_pad), jnp.float32),
        grid=(num_tiles,),
        in_specs=[
            # Per-step batch tile (the only array that changes per grid step).
            # TODO(synk): add pipeline_mode=pl.Buffered(3) here only if a
            # trace shows exposed DMA at large tb.
            pl.BlockSpec((dim_in, tb), lambda i: (0, i)),
            pl.BlockSpec((H, dim_in), lambda i: (0, 0)),        # w1.T (resident)
            pl.BlockSpec((H, 1), lambda i: (0, 0)),             # b1 column
            pl.BlockSpec((H, H), lambda i: (0, 0)),             # w2.T (resident)
            pl.BlockSpec((H, 1), lambda i: (0, 0)),             # b2 column
            pl.BlockSpec((1, H), lambda i: (0, 0)),             # w3 row
            pl.BlockSpec(memory_space=pltpu.MemorySpace.SMEM),  # b3 scalar
        ],
        out_specs=pl.BlockSpec((1, tb), lambda i: (0, i)),
        compiler_params=pltpu.CompilerParams(
            dimension_semantics=("parallel",),   # megacore-shardable on v7x
        ),
        cost_estimate=cost,
    )(z_t, w1_t, b1_c, w2_t, b2_c, w3_row, b3_s)

    # (1, b_pad) flattens row-major in batch order; drop padding.
    return out.reshape(b_pad, 1)[:B]


# ----------------------------------------------------------------------------
# Deterministic parameter construction (mimics nn.Linear default init) and a
# pure-JAX reference for correctness checking.
# ----------------------------------------------------------------------------
def make_params(key, dim_in, hidden):
    ks = jax.random.split(key, 6)

    def linear(k_w, k_b, fan_in, fan_out):
        bound = 1.0 / jnp.sqrt(jnp.float32(fan_in))
        w = jax.random.uniform(k_w, (fan_in, fan_out), jnp.float32, -bound, bound)
        b = jax.random.uniform(k_b, (1, fan_out), jnp.float32, -bound, bound)
        return w, b

    w1, b1 = linear(ks[0], ks[1], dim_in, hidden)
    w2, b2 = linear(ks[2], ks[3], hidden, hidden)
    w3, b3 = linear(ks[4], ks[5], hidden, 1)
    return (w1, b1, w2, b2, w3, b3)


def reference_forward(z, params):
    w1, b1, w2, b2, w3, b3 = params
    h1 = jnp.maximum(z @ w1 + b1, 0.0)
    h2 = jnp.maximum(h1 @ w2 + b2, 0.0)
    return h2 @ w3 + b3


if __name__ == "__main__":
    # Module config: dim_x=6, dim_u=4 -> dim_in = dim_x + dim_u + dim_x = 16.
    dim_x, dim_u = 6, 4
    dim_in = dim_x + dim_u + dim_x      # 16
    hidden = 32
    B = 16

    key = jax.random.PRNGKey(0)
    k_z, k_p, k_z2 = jax.random.split(key, 3)
    z_batch = jax.random.normal(k_z, (B, dim_in), jnp.float32)
    params = make_params(k_p, dim_in, hidden)

    # TODO(synk): train_network / evaluate_loss / DataDistance softmin target /
    # get_energy_gradients (autograd) are training utilities, not forward; not ported.

    # f32 path (v5e configuration): tiny demo batch -> single 128-wide tile.
    out = jax.block_until_ready(ddexux_forward(z_batch, params))
    ref = reference_forward(z_batch, params)
    assert out.shape == (B, 1)
    assert jnp.allclose(out, ref, atol=1e-4, rtol=1e-4), "f32 mismatch vs reference"

    # Larger ragged batch with bf16 MXU inputs (v6e/v7x configuration) and
    # 2-way-balanced tiles (v7x megacore): exercises the multi-tile grid and
    # the zero-pad tail path.
    B2 = 300
    z_big = jax.random.normal(k_z2, (B2, dim_in), jnp.float32)
    out_bf16 = jax.block_until_ready(
        ddexux_forward(z_big, params, compute_dtype=jnp.bfloat16, num_cores=2))
    ref_big = reference_forward(z_big, params)
    assert out_bf16.shape == (B2, 1)
    assert jnp.allclose(out_bf16, ref_big, atol=1e-1, rtol=5e-2), \
        "bf16 mismatch vs reference"

    print("KERNEL_OK")
</pallas_src>

<mosaic_0001>
module attributes {stable_mosaic.version = 11 : i64} {
  func.func @mlp_kernel(%arg0: i32, %arg1: memref<16x128xf32, #tpu.memory_space<vmem>>, %arg2: memref<32x16xf32, #tpu.memory_space<vmem>>, %arg3: memref<32x1xf32, #tpu.memory_space<vmem>>, %arg4: memref<32x32xf32, #tpu.memory_space<vmem>>, %arg5: memref<32x1xf32, #tpu.memory_space<vmem>>, %arg6: memref<1x32xf32, #tpu.memory_space<vmem>>, %arg7: memref<1xf32, #tpu.memory_space<smem>>, %arg8: memref<1x128xf32, #tpu.memory_space<vmem>>) attributes {dimension_semantics = [#tpu.dimension_semantics<parallel>], iteration_bounds = array<i64: 1>, scalar_prefetch = 0 : i64, scratch_operands = 0 : i64, tpu.core_type = #tpu.core_type<tc>, window_params = [{transform_indices = @transform_0, window_bounds = array<i64: 16, 128>}, {pipeline_mode = #tpu.pipeline_mode<synchronous>, transform_indices = @transform_1, window_bounds = array<i64: 32, 16>}, {pipeline_mode = #tpu.pipeline_mode<synchronous>, transform_indices = @transform_2, window_bounds = array<i64: 32, 1>}, {pipeline_mode = #tpu.pipeline_mode<synchronous>, transform_indices = @transform_3, window_bounds = array<i64: 32, 32>}, {pipeline_mode = #tpu.pipeline_mode<synchronous>, transform_indices = @transform_4, window_bounds = array<i64: 32, 1>}, {pipeline_mode = #tpu.pipeline_mode<synchronous>, transform_indices = @transform_5, window_bounds = array<i64: 1, 32>}, {transform_indices = @transform_6, window_bounds = array<i64: 1>}, {transform_indices = @transform_7, window_bounds = array<i64: 1, 128>}]} {
    %c0 = arith.constant 0 : index
    %c0_0 = arith.constant 0 : index
    %0 = vector.load %arg1[%c0, %c0_0] : memref<16x128xf32, #tpu.memory_space<vmem>>, vector<16x128xf32>
    %c0_1 = arith.constant 0 : index
    %c0_2 = arith.constant 0 : index
    %1 = vector.load %arg2[%c0_1, %c0_2] : memref<32x16xf32, #tpu.memory_space<vmem>>, vector<32x16xf32>
    %cst = arith.constant dense<0.000000e+00> : vector<32x128xf32>
    %2 = tpu.matmul %1, %0, %cst {dimension_numbers = #tpu.dot_dimension_numbers<[1], [0], [0], [1], [0, 0, 1, 1], [], []>} : vector<32x16xf32>, vector<16x128xf32>, vector<32x128xf32> -> vector<32x128xf32>
    %c0_3 = arith.constant 0 : index
    %c0_4 = arith.constant 0 : index
    %3 = vector.load %arg3[%c0_3, %c0_4] : memref<32x1xf32, #tpu.memory_space<vmem>>, vector<32x1xf32>
    %4 = vector.broadcast %3 : vector<32x1xf32> to vector<32x128xf32>
    %5 = arith.addf %2, %4 : vector<32x128xf32>
    %cst_5 = arith.constant 0.000000e+00 : f32
    %6 = vector.broadcast %cst_5 : f32 to vector<32x128xf32>
    %7 = arith.maximumf %5, %6 : vector<32x128xf32>
    %c0_6 = arith.constant 0 : index
    %c0_7 = arith.constant 0 : index
    %8 = vector.load %arg4[%c0_6, %c0_7] : memref<32x32xf32, #tpu.memory_space<vmem>>, vector<32x32xf32>
    %cst_8 = arith.constant dense<0.000000e+00> : vector<32x128xf32>
    %9 = tpu.matmul %8, %7, %cst_8 {dimension_numbers = #tpu.dot_dimension_numbers<[1], [0], [0], [1], [0, 0, 1, 1], [], []>} : vector<32x32xf32>, vector<32x128xf32>, vector<32x128xf32> -> vector<32x128xf32>
    %c0_9 = arith.constant 0 : index
    %c0_10 = arith.constant 0 : index
    %10 = vector.load %arg5[%c0_9, %c0_10] : memref<32x1xf32, #tpu.memory_space<vmem>>, vector<32x1xf32>
    %11 = vector.broadcast %10 : vector<32x1xf32> to vector<32x128xf32>
    %12 = arith.addf %9, %11 : vector<32x128xf32>
    %cst_11 = arith.constant 0.000000e+00 : f32
    %13 = vector.broadcast %cst_11 : f32 to vector<32x128xf32>
    %14 = arith.maximumf %12, %13 : vector<32x128xf32>
    %c0_12 = arith.constant 0 : index
    %c0_13 = arith.constant 0 : index
    %15 = vector.load %arg6[%c0_12, %c0_13] : memref<1x32xf32, #tpu.memory_space<vmem>>, vector<1x32xf32>
    %cst_14 = arith.constant dense<0.000000e+00> : vector<1x128xf32>
    %16 = tpu.matmul %15, %14, %cst_14 {dimension_numbers = #tpu.dot_dimension_numbers<[1], [0], [0], [1], [0, 0, 1, 1], [], []>} : vector<1x32xf32>, vector<32x128xf32>, vector<1x128xf32> -> vector<1x128xf32>
    %c0_15 = arith.constant 0 : index
    %17 = memref.load %arg7[%c0_15] : memref<1xf32, #tpu.memory_space<smem>>
    %18 = vector.broadcast %17 : f32 to vector<1x128xf32>
    %19 = arith.addf %16, %18 : vector<1x128xf32>
    %c0_16 = arith.constant 0 : index
    %c0_17 = arith.constant 0 : index
    %20 = vector.load %arg8[%c0_16, %c0_17] : memref<1x128xf32, #tpu.memory_space<vmem>>, vector<1x128xf32>
    tpu.vector_store %arg8[%c0_16, %c0_17], %19 {strides = array<i32>} : memref<1x128xf32, #tpu.memory_space<vmem>>, vector<1x128xf32>,
    return
  }
  func.func @transform_0(%arg0: i32) -> (i32, i32) {
    %c0_i32 = arith.constant 0 : i32
    %c0_i32_0 = arith.constant 0 : i32
    return %c0_i32, %arg0 : i32, i32
  }
  func.func @transform_1(%arg0: i32) -> (i32, i32) {
    %c0_i32 = arith.constant 0 : i32
    %c0_i32_0 = arith.constant 0 : i32
    %c0_i32_1 = arith.constant 0 : i32
    return %c0_i32, %c0_i32_0 : i32, i32
  }
  func.func @transform_2(%arg0: i32) -> (i32, i32) {
    %c0_i32 = arith.constant 0 : i32
    %c0_i32_0 = arith.constant 0 : i32
    %c0_i32_1 = arith.constant 0 : i32
    return %c0_i32, %c0_i32_0 : i32, i32
  }
  func.func @transform_3(%arg0: i32) -> (i32, i32) {
    %c0_i32 = arith.constant 0 : i32
    %c0_i32_0 = arith.constant 0 : i32
    %c0_i32_1 = arith.constant 0 : i32
    return %c0_i32, %c0_i32_0 : i32, i32
  }
  func.func @transform_4(%arg0: i32) -> (i32, i32) {
    %c0_i32 = arith.constant 0 : i32
    %c0_i32_0 = arith.constant 0 : i32
    %c0_i32_1 = arith.constant 0 : i32
    return %c0_i32, %c0_i32_0 : i32, i32
  }
  func.func @transform_5(%arg0: i32) -> (i32, i32) {
    %c0_i32 = arith.constant 0 : i32
    %c0_i32_0 = arith.constant 0 : i32
    %c0_i32_1 = arith.constant 0 : i32
    return %c0_i32, %c0_i32_0 : i32, i32
  }
  func.func @transform_6(%arg0: i32) -> i32 {
    %c0_i32 = arith.constant 0 : i32
    %c0_i32_0 = arith.constant 0 : i32
    return %c0_i32 : i32
  }
  func.func @transform_7(%arg0: i32) -> (i32, i32) {
    %c0_i32 = arith.constant 0 : i32
    %c0_i32_0 = arith.constant 0 : i32
    return %c0_i32, %arg0 : i32, i32
  }
}

</mosaic_0001>

<llo_original>
// kernel: tpu_custom_call.1
$region0: #{tpu_custom_call.1}
  #allocation0 [shape = 'u32[]', space=smem, size = 0x4, offset = 0x4, fixed_abs, tag = 'smem constant byte address 0x4 - core index']
  #allocation1 [shape = 'u32[144,128]{1,0:T(1,128)}', space=vmem, size = 0x12000, scoped, tag = 'internal scratch']
  #allocation2 [shape = 'f32[1]{0:T(128)S(6)}', space=smem, size = 0x200, scoped, tag = 'scoped memory for tpu_custom_call.1']
  %s0 = inlined_call_operand.vmem [shape: f32[16,128], index: 0, kind: input, shape index: {}]
  %s1 = inlined_call_operand.vmem [shape: f32[32,16], index: 1, kind: input, shape index: {}]
  %s2 = inlined_call_operand.vmem [shape: f32[32,1], index: 2, kind: input, shape index: {}]
  %s3 = inlined_call_operand.vmem [shape: f32[32,32], index: 3, kind: input, shape index: {}]
  %s4 = inlined_call_operand.vmem [shape: f32[32,1], index: 4, kind: input, shape index: {}]
  %s5 = inlined_call_operand.vmem [shape: f32[1,32], index: 5, kind: input, shape index: {}]
  %s6 = inlined_call_operand.<no memory space> [shape: f32[1], index: 6, kind: input, shape index: {}]
  %s7 = inlined_call_operand.hbm [shape: f32[1,128], index: 7, kind: output, shape index: {}]
  %s8 = sld [smem:[#allocation0]]
  $region38: #{tpu_custom_call.1} parent=0
    _
  %s10 = ssub.s32 1, %s8
  %s11 = scalar_select 0, %s10, %s8
  %12 = sst [smem:[#allocation2]] %s6
  $region1: #{tpu_custom_call.1} parent=0
    #allocation3 [shape = 'u8[512]{0}', space=vmem, size = 0x400, scoped, tag = 'output window, operand 0, single buffered']
    #allocation4 [shape = 's32[1]{0}', space=sflag, size = 0x4, scoped, tag = 'scoped memory for tpu_custom_call.1']
    %13 = vsyncpa [#allocation4], 0
    // Predicated region
    $region2: #{tpu_custom_call.1} parent=1 // pred_check
      _
    $region3: #{tpu_custom_call.1} parent=1 // pred_check_branch
      %15 = sbr.rel (0) target = $region5
    $region4: #{tpu_custom_call.1} parent=1 // pred_region
      _
    $region5: #{tpu_custom_call.1} parent=1 // pred_fallthru
      _
    // Predicated region
    $region6: #{tpu_custom_call.1} parent=1 // pred_check
      _
    $region7: #{tpu_custom_call.1} parent=1 // pred_check_branch
      %17 = sbr.rel (0) target = $region9
    $region8: #{tpu_custom_call.1} parent=1 // pred_region
      _
    $region9: #{tpu_custom_call.1} parent=1 // pred_fallthru
      _
    // Predicated region
    $region10: #{tpu_custom_call.1} parent=1 // pred_check
      _
    $region11: #{tpu_custom_call.1} parent=1 // pred_check_branch
      %19 = sbr.rel (0) target = $region13
    $region12: #{tpu_custom_call.1} parent=1 // pred_region
      _
    $region13: #{tpu_custom_call.1} parent=1 // pred_fallthru
      _
    // Predicated region
    $region14: #{tpu_custom_call.1} parent=1 // pred_check
      _
    $region15: #{tpu_custom_call.1} parent=1 // pred_check_branch
      %21 = sbr.rel (0) target = $region17
    $region16: #{tpu_custom_call.1} parent=1 // pred_region
      _
    $region17: #{tpu_custom_call.1} parent=1 // pred_fallthru
      _
    // Predicated region
    $region18: #{tpu_custom_call.1} parent=1 // pred_check
      _
    $region19: #{tpu_custom_call.1} parent=1 // pred_check_branch
      %23 = sbr.rel (0) target = $region21
    $region20: #{tpu_custom_call.1} parent=1 // pred_region
      _
    $region21: #{tpu_custom_call.1} parent=1 // pred_fallthru
      _
    // Predicated region
    $region22: #{tpu_custom_call.1} parent=1 // pred_check
      _
    $region23: #{tpu_custom_call.1} parent=1 // pred_check_branch
      %25 = sbr.rel (0) target = $region25
    $region24: #{tpu_custom_call.1} parent=1 // pred_region
      _
    $region25: #{tpu_custom_call.1} parent=1 // pred_fallthru
      _
    // Predicated region
    $region26: #{tpu_custom_call.1} parent=1 // pred_check
      _
    $region27: #{tpu_custom_call.1} parent=1 // pred_check_branch
      %27 = sbr.rel (0) target = $region29
    $region28: #{tpu_custom_call.1} parent=1 // pred_region
      _
    $region29: #{tpu_custom_call.1} parent=1 // pred_fallthru
      _
    %v28 = vld [vmem:[%s0] sm:$0xff]
    %v29 = vld [vmem:[%s0 + $0x8] sm:$0xff]
    %v30 = vld [vmem:[%s1] sm:$0xff]
    %v31 = vld [vmem:[%s1 + $0x8] sm:$0xff]
    %v32 = vld [vmem:[%s1 + $0x10] sm:$0xff]
    %v33 = vld [vmem:[%s1 + $0x18] sm:$0xff]
    %v34 = vld [vmem:[%s2] sm:$0xff]
    %v35 = vld [vmem:[%s2 + $0x8] sm:$0xff]
    %v36 = vld [vmem:[%s2 + $0x10] sm:$0xff]
    %v37 = vld [vmem:[%s2 + $0x18] sm:$0xff]
    %39 = vset.pattern.permute.xlu0 0
    %40 = vperm.xlu0 %39, %v34
    %v41 = vpop.permute.xlu0 %40
    %44 = vset.pattern.permute.xlu0 0
    %45 = vperm.xlu0 %44, %v35
    %v46 = vpop.permute.xlu0 %45
    %49 = vset.pattern.permute.xlu0 0
    %50 = vperm.xlu0 %49, %v36
    %v51 = vpop.permute.xlu0 %50
    %54 = vset.pattern.permute.xlu0 0
    %55 = vperm.xlu0 %54, %v37
    %v56 = vpop.permute.xlu0 %55
    %vm58 = vcmask 130048
    %v60 = vsel %vm58, %v30, 0
    %v63 = vsel %vm58, %v31, 0
    %v66 = vsel %vm58, %v32, 0
    %v69 = vsel %vm58, %v33, 0
    %71 = vmatprep.subr.mxu0 0.0
    %72 = vmatpush1.msra.mxu0 %v28
    %73 = vmatprep.subr.mxu0 0.0
    %74 = vmatpush1.msra.mxu0 %v29
    %75 = vmatprep.subr.mxu0 0.0
    %76 = vmatpush1.msra.mxu0 0.0
    %77 = vmatprep.subr.mxu0 0.0
    %78 = vmatpush1.msra.mxu0 0.0
    %79 = vmatprep.subr.mxu0 0.0
    %80 = vmatpush1.msra.mxu0 0.0
    %81 = vmatprep.subr.mxu0 0.0
    %82 = vmatpush1.msra.mxu0 0.0
    %83 = vmatprep.subr.mxu0 0.0
    %84 = vmatpush1.msra.mxu0 0.0
    %85 = vmatprep.subr.mxu0 0.0
    %86 = vmatpush1.msra.mxu0 0.0
    %87 = vmatprep.subr.mxu0 0.0
    %88 = vmatpush1.msra.mxu0 0.0
    %89 = vmatprep.subr.mxu0 0.0
    %90 = vmatpush1.msra.mxu0 0.0
    %91 = vmatprep.subr.mxu0 0.0
    %92 = vmatpush1.msra.mxu0 0.0
    %93 = vmatprep.subr.mxu0 0.0
    %94 = vmatpush1.msra.mxu0 0.0
    %95 = vmatprep.subr.mxu0 0.0
    %96 = vmatpush1.msra.mxu0 0.0
    %97 = vmatprep.subr.mxu0 0.0
    %98 = vmatpush1.msra.mxu0 0.0
    %99 = vmatprep.subr.mxu0 0.0
    %100 = vmatpush1.msra.mxu0 0.0
    %101 = vmatprep.subr.mxu0 0.0
    %102 = vmatpush1.msra.mxu0 0.0
    %103 = vmatprep.subr.mxu0 0.0
    %104 = vmatpush1.msra.mxu0 0.0
    %105 = vmatprep.subr.mxu0 0.0
    %106 = vmatpush1.msra.mxu0 0.0
    %107 = vmatprep.subr.mxu0 0.0
    %108 = vmatpush1.msra.mxu0 0.0
    %109 = vmatprep.subr.mxu0 0.0
    %110 = vmatpush1.msra.mxu0 0.0
    %111 = vmatprep.subr.mxu0 0.0
    %112 = vmatpush1.msra.mxu0 0.0
    %113 = vmatprep.subr.mxu0 0.0
    %114 = vmatpush1.msra.mxu0 0.0
    %115 = vmatprep.subr.mxu0 0.0
    %116 = vmatpush1.msra.mxu0 0.0
    %117 = vmatprep.subr.mxu0 0.0
    %118 = vmatpush1.msra.mxu0 0.0
    %119 = vmatprep.subr.mxu0 0.0
    %120 = vmatpush1.msra.mxu0 0.0
    %121 = vmatprep.subr.mxu0 0.0
    %122 = vmatpush1.msra.mxu0 0.0
    %123 = vmatprep.subr.mxu0 0.0
    %124 = vmatpush1.msra.mxu0 0.0
    %125 = vmatprep.subr.mxu0 0.0
    %126 = vmatpush1.msra.mxu0 0.0
    %127 = vmatprep.subr.mxu0 0.0
    %128 = vmatpush1.msra.mxu0 0.0
    %129 = vmatprep.subr.mxu0 0.0
    %130 = vmatpush1.msra.mxu0 0.0
    %131 = vmatprep.subr.mxu0 0.0
    %132 = vmatpush1.msra.mxu0 0.0
    %133 = vmatprep.subr.mxu0 0.0
    %134 = vmatpush1.msra.mxu0 0.0
    %135 = vmatprep.mubr.f32.mxu0 0.0
    %136 = vmatmul.mubr.f32.gmra.mrb[0].mxu0 %v60
    %v137 = vpop.f32.mrb[0].mxu0
    %v138 = vadd.f32 %v41, %v137
    %v139 = vpop.f32.mrb[0].mxu0
    %140 = vmatprep.mubr.f32.mxu0 0.0
    %141 = vmatmul.mubr.f32.gmra.mrb[0].mxu0 %v63
    %v142 = vpop.f32.mrb[0].mxu0
    %v143 = vadd.f32 %v46, %v142
    %v144 = vpop.f32.mrb[0].mxu0
    %145 = vmatprep.mubr.f32.mxu0 0.0
    %146 = vmatmul.mubr.f32.gmra.mrb[0].mxu0 %v66
    %v147 = vpop.f32.mrb[0].mxu0
    %v148 = vadd.f32 %v51, %v147
    %v149 = vpop.f32.mrb[0].mxu0
    %150 = vmatprep.mubr.f32.mxu0 0.0
    %151 = vmatmul.mubr.f32.gmra.mrb[0].mxu0 %v69
    %v152 = vpop.f32.mrb[0].mxu0
    %v153 = vadd.f32 %v56, %v152
    %v154 = vpop.f32.mrb[0].mxu0
    %155 = vdwg.mxu0
    %v156 = vmax.f32 %v138, 0.0
    %v157 = vmax.f32 %v143, 0.0
    %v158 = vmax.f32 %v148, 0.0
    %v159 = vmax.f32 %v153, 0.0
    %v160 = vld [vmem:[%s3] sm:$0xff]
    %v161 = vld [vmem:[%s3 + $0x8] sm:$0xff]
    %v162 = vld [vmem:[%s3 + $0x10] sm:$0xff]
    %v163 = vld [vmem:[%s3 + $0x18] sm:$0xff]
    %v164 = vld [vmem:[%s4] sm:$0xff]
    %v165 = vld [vmem:[%s4 + $0x8] sm:$0xff]
    %v166 = vld [vmem:[%s4 + $0x10] sm:$0xff]
    %v167 = vld [vmem:[%s4 + $0x18] sm:$0xff]
    %169 = vset.pattern.permute.xlu0 0
    %170 = vperm.xlu0 %169, %v164
    %v171 = vpop.permute.xlu0 %170
    %174 = vset.pattern.permute.xlu0 0
    %175 = vperm.xlu0 %174, %v165
    %v176 = vpop.permute.xlu0 %175
    %179 = vset.pattern.permute.xlu0 0
    %180 = vperm.xlu0 %179, %v166
    %v181 = vpop.permute.xlu0 %180
    %184 = vset.pattern.permute.xlu0 0
    %185 = vperm.xlu0 %184, %v167
    %v186 = vpop.permute.xlu0 %185
    %vm188 = vcmask 261120
    %v190 = vsel %vm188, %v160, 0
    %v193 = vsel %vm188, %v161, 0
    %v196 = vsel %vm188, %v162, 0
    %v199 = vsel %vm188, %v163, 0
    %201 = vmatprep.subr.mxu0 0.0
    %202 = vmatpush1.msra.mxu0 %v156
    %203 = vmatprep.subr.mxu0 0.0
    %204 = vmatpush1.msra.mxu0 %v157
    %205 = vmatprep.subr.mxu0 0.0
    %206 = vmatpush1.msra.mxu0 %v158
    %207 = vmatprep.subr.mxu0 0.0
    %208 = vmatpush1.msra.mxu0 %v159
    %209 = vmatprep.subr.mxu0 0.0
    %210 = vmatpush1.msra.mxu0 0.0
    %211 = vmatprep.subr.mxu0 0.0
    %212 = vmatpush1.msra.mxu0 0.0
    %213 = vmatprep.subr.mxu0 0.0
    %214 = vmatpush1.msra.mxu0 0.0
    %215 = vmatprep.subr.mxu0 0.0
    %216 = vmatpush1.msra.mxu0 0.0
    %217 = vmatprep.subr.mxu0 0.0
    %218 = vmatpush1.msra.mxu0 0.0
    %219 = vmatprep.subr.mxu0 0.0
    %220 = vmatpush1.msra.mxu0 0.0
    %221 = vmatprep.subr.mxu0 0.0
    %222 = vmatpush1.msra.mxu0 0.0
    %223 = vmatprep.subr.mxu0 0.0
    %224 = vmatpush1.msra.mxu0 0.0
    %225 = vmatprep.subr.mxu0 0.0
    %226 = vmatpush1.msra.mxu0 0.0
    %227 = vmatprep.subr.mxu0 0.0
    %228 = vmatpush1.msra.mxu0 0.0
    %229 = vmatprep.subr.mxu0 0.0
    %230 = vmatpush1.msra.mxu0 0.0
    %231 = vmatprep.subr.mxu0 0.0
    %232 = vmatpush1.msra.mxu0 0.0
    %233 = vmatprep.subr.mxu0 0.0
    %234 = vmatpush1.msra.mxu0 0.0
    %235 = vmatprep.subr.mxu0 0.0
    %236 = vmatpush1.msra.mxu0 0.0
    %237 = vmatprep.subr.mxu0 0.0
    %238 = vmatpush1.msra.mxu0 0.0
    %239 = vmatprep.subr.mxu0 0.0
    %240 = vmatpush1.msra.mxu0 0.0
    %241 = vmatprep.subr.mxu0 0.0
    %242 = vmatpush1.msra.mxu0 0.0
    %243 = vmatprep.subr.mxu0 0.0
    %244 = vmatpush1.msra.mxu0 0.0
    %245 = vmatprep.subr.mxu0 0.0
    %246 = vmatpush1.msra.mxu0 0.0
    %247 = vmatprep.subr.mxu0 0.0
    %248 = vmatpush1.msra.mxu0 0.0
    %249 = vmatprep.subr.mxu0 0.0
    %250 = vmatpush1.msra.mxu0 0.0
    %251 = vmatprep.subr.mxu0 0.0
    %252 = vmatpush1.msra.mxu0 0.0
    %253 = vmatprep.subr.mxu0 0.0
    %254 = vmatpush1.msra.mxu0 0.0
    %255 = vmatprep.subr.mxu0 0.0
    %256 = vmatpush1.msra.mxu0 0.0
    %257 = vmatprep.subr.mxu0 0.0
    %258 = vmatpush1.msra.mxu0 0.0
    %259 = vmatprep.subr.mxu0 0.0
    %260 = vmatpush1.msra.mxu0 0.0
    %261 = vmatprep.subr.mxu0 0.0
    %262 = vmatpush1.msra.mxu0 0.0
    %263 = vmatprep.subr.mxu0 0.0
    %264 = vmatpush1.msra.mxu0 0.0
    %265 = vmatprep.mubr.f32.mxu0 0.0
    %266 = vmatmul.mubr.f32.gmra.mrb[0].mxu0 %v190
    %v267 = vpop.f32.mrb[0].mxu0
    %v268 = vadd.f32 %v171, %v267
    %v269 = vpop.f32.mrb[0].mxu0
    %270 = vmatprep.mubr.f32.mxu0 0.0
    %271 = vmatmul.mubr.f32.gmra.mrb[0].mxu0 %v193
    %v272 = vpop.f32.mrb[0].mxu0
    %v273 = vadd.f32 %v176, %v272
    %v274 = vpop.f32.mrb[0].mxu0
    %275 = vmatprep.mubr.f32.mxu0 0.0
    %276 = vmatmul.mubr.f32.gmra.mrb[0].mxu0 %v196
    %v277 = vpop.f32.mrb[0].mxu0
    %v278 = vadd.f32 %v181, %v277
    %v279 = vpop.f32.mrb[0].mxu0
    %280 = vmatprep.mubr.f32.mxu0 0.0
    %281 = vmatmul.mubr.f32.gmra.mrb[0].mxu0 %v199
    %v282 = vpop.f32.mrb[0].mxu0
    %v283 = vadd.f32 %v186, %v282
    %v284 = vpop.f32.mrb[0].mxu0
    %285 = vdwg.mxu0
    %v286 = vmax.f32 %v268, 0.0
    %v287 = vmax.f32 %v273, 0.0
    %v288 = vmax.f32 %v278, 0.0
    %v289 = vmax.f32 %v283, 0.0
    %v290 = vld [vmem:[%s5] sm:$0x1]
    %s291 = sld [smem:[#allocation2]]
    %v292 = vstv %s291
    %v294 = vsel %vm188, %v290, 0
    %296 = vmatprep.subr.mxu0 0.0
    %297 = vmatpush1.msra.mxu0 %v286
    %298 = vmatprep.subr.mxu0 0.0
    %299 = vmatpush1.msra.mxu0 %v287
    %300 = vmatprep.subr.mxu0 0.0
    %301 = vmatpush1.msra.mxu0 %v288
    %302 = vmatprep.subr.mxu0 0.0
    %303 = vmatpush1.msra.mxu0 %v289
    %304 = vmatprep.subr.mxu0 0.0
    %305 = vmatpush1.msra.mxu0 0.0
    %306 = vmatprep.subr.mxu0 0.0
    %307 = vmatpush1.msra.mxu0 0.0
    %308 = vmatprep.subr.mxu0 0.0
    %309 = vmatpush1.msra.mxu0 0.0
    %310 = vmatprep.subr.mxu0 0.0
    %311 = vmatpush1.msra.mxu0 0.0
    %312 = vmatprep.subr.mxu0 0.0
    %313 = vmatpush1.msra.mxu0 0.0
    %314 = vmatprep.subr.mxu0 0.0
    %315 = vmatpush1.msra.mxu0 0.0
    %316 = vmatprep.subr.mxu0 0.0
    %317 = vmatpush1.msra.mxu0 0.0
    %318 = vmatprep.subr.mxu0 0.0
    %319 = vmatpush1.msra.mxu0 0.0
    %320 = vmatprep.subr.mxu0 0.0
    %321 = vmatpush1.msra.mxu0 0.0
    %322 = vmatprep.subr.mxu0 0.0
    %323 = vmatpush1.msra.mxu0 0.0
    %324 = vmatprep.subr.mxu0 0.0
    %325 = vmatpush1.msra.mxu0 0.0
    %326 = vmatprep.subr.mxu0 0.0
    %327 = vmatpush1.msra.mxu0 0.0
    %328 = vmatprep.subr.mxu0 0.0
    %329 = vmatpush1.msra.mxu0 0.0
    %330 = vmatprep.subr.mxu0 0.0
    %331 = vmatpush1.msra.mxu0 0.0
    %332 = vmatprep.subr.mxu0 0.0
    %333 = vmatpush1.msra.mxu0 0.0
    %334 = vmatprep.subr.mxu0 0.0
    %335 = vmatpush1.msra.mxu0 0.0
    %336 = vmatprep.subr.mxu0 0.0
    %337 = vmatpush1.msra.mxu0 0.0
    %338 = vmatprep.subr.mxu0 0.0
    %339 = vmatpush1.msra.mxu0 0.0
    %340 = vmatprep.subr.mxu0 0.0
    %341 = vmatpush1.msra.mxu0 0.0
    %342 = vmatprep.subr.mxu0 0.0
    %343 = vmatpush1.msra.mxu0 0.0
    %344 = vmatprep.subr.mxu0 0.0
    %345 = vmatpush1.msra.mxu0 0.0
    %346 = vmatprep.subr.mxu0 0.0
    %347 = vmatpush1.msra.mxu0 0.0
    %348 = vmatprep.subr.mxu0 0.0
    %349 = vmatpush1.msra.mxu0 0.0
    %350 = vmatprep.subr.mxu0 0.0
    %351 = vmatpush1.msra.mxu0 0.0
    %352 = vmatprep.subr.mxu0 0.0
    %353 = vmatpush1.msra.mxu0 0.0
    %354 = vmatprep.subr.mxu0 0.0
    %355 = vmatpush1.msra.mxu0 0.0
    %356 = vmatprep.subr.mxu0 0.0
    %357 = vmatpush1.msra.mxu0 0.0
    %358 = vmatprep.subr.mxu0 0.0
    %359 = vmatpush1.msra.mxu0 0.0
    %360 = vmatprep.mubr.f32.mxu0 0.0
    %361 = vmatmul.mubr.f32.gmra.mrb[0].mxu0 %v294
    %v362 = vpop.f32.mrb[0].mxu0
    %v363 = vadd.f32 %v292, %v362
    %v364 = vpop.f32.mrb[0].mxu0
    %365 = vdwg.mxu0
    %366 = vst [vmem:[#allocation3] sm:$0x1] %v363
    // Predicated region
    $region30: #{tpu_custom_call.1} parent=1 // pred_check
      _
    $region31: #{tpu_custom_call.1} parent=1 // pred_check_branch
      %368 = sbr.rel (0) target = $region33
    $region32: #{tpu_custom_call.1} parent=1 // pred_region
      %s370 = ssub.s32 16, 16
      %371 = vsyncadd [#allocation4], %s370
      %s373 = sshll.u32 [#allocation3], 4
      %s374 = int_to_ptr.vmem [resolvable:$true] %s373
      %376 = dma.vmem_to_hbm [thread:$0]  %s374, 16, %s7, [#allocation4]
    $region33: #{tpu_custom_call.1} parent=1 // pred_fallthru
      _
    // Predicated region
    $region34: #{tpu_custom_call.1} parent=1 // pred_check
      _
    $region35: #{tpu_custom_call.1} parent=1 // pred_check_branch
      %378 = sbr.rel (0) target = $region37
    $region36: #{tpu_custom_call.1} parent=1 // pred_region
      %379 = dma.done [#allocation4], 16
    $region37: #{tpu_custom_call.1} parent=1 // pred_fallthru
      _
    %380 = vsyncpa [#allocation4], 1

</llo_original>
